<compile_context>
chip_gen: v7x
topology: tpu7x:2x2x1
jax: 0.10.0
libtpu: 0.0.40
codegen_flags: <defaults>
</compile_context>

<pallas_src>
import jax
import jax.numpy as jnp
from jax import lax
from jax.experimental import pallas as pl
from jax.experimental.pallas import tpu as pltpu


def _round_up(x, m):
    return ((x + m - 1) // m) * m


def _sparse_linear_kernel(x_ref, w_ref, m_ref, b_ref, o_ref, acc_ref):
    k = pl.program_id(2)

    @pl.when(k == 0)
    def _init():
        acc_ref[...] = jnp.zeros_like(acc_ref)

    # Sparsify the weight tile on the VPU (int8 mask -> select; VPU has huge
    # slack under the MXU so this is effectively free).
    mw = jnp.where(m_ref[...] != 0, w_ref[...], jnp.zeros_like(w_ref[...]))

    # Contract K of both operands directly: (tb,tk) x (tn,tk) -> (tb,tn).
    # Avoids an explicit mw.T (XLU transpose / VMEM relayout).
    acc_ref[...] += lax.dot_general(
        x_ref[...],
        mw,
        dimension_numbers=(((1,), (1,)), ((), ())),
        preferred_element_type=jnp.float32,
    )

    @pl.when(k == pl.num_programs(2) - 1)
    def _finalize():
        # Bias add only in the finalize branch, outside the hot K loop.
        o_ref[...] = (acc_ref[...] + b_ref[...]).astype(o_ref.dtype)


def sparse_connected_forward(x, weight, mask, bias):
    """x:(B,K) f32, weight:(N,K) f32, mask:(N,K), bias:(N,) f32 -> (B,N) f32."""
    B, K = x.shape
    N, K2 = weight.shape
    assert K == K2 and mask.shape == (N, K) and bias.shape == (N,)

    # ---- Pad to TPU-friendly, lane-dense sizes and pick tile sizes ---------
    if B <= 128:
        Bp = _round_up(B, 8)
        tb = Bp
    else:
        Bp = _round_up(B, 128)
        tb = 128

    Np = _round_up(N, 128)                       # lane-dense output last dim
    tn = 256 if Np % 256 == 0 else 128

    Kp = _round_up(K, 128)
    tk = 512 if Kp % 512 == 0 else (256 if Kp % 256 == 0 else 128)

    # Zero padding is exact: padded K columns of x/weight contribute 0 to the
    # dot; padded N rows produce outputs that are sliced away below.
    xp = jnp.pad(x, ((0, Bp - B), (0, Kp - K)))
    wp = jnp.pad(weight, ((0, Np - N), (0, Kp - K)))
    mp = jnp.pad((mask != 0).astype(jnp.int8), ((0, Np - N), (0, Kp - K)))
    bp = jnp.pad(bias, (0, Np - N)).reshape(1, Np)

    grid = (Bp // tb, Np // tn, Kp // tk)

    out_padded = pl.pallas_call(
        _sparse_linear_kernel,
        out_shape=jax.ShapeDtypeStruct((Bp, Np), x.dtype),
        grid_spec=pltpu.PrefetchScalarGridSpec(
            num_scalar_prefetch=0,
            grid=grid,
            in_specs=[
                pl.BlockSpec((tb, tk), lambda i, j, k: (i, k)),   # x
                pl.BlockSpec((tn, tk), lambda i, j, k: (j, k)),   # weight
                pl.BlockSpec((tn, tk), lambda i, j, k: (j, k)),   # mask (int8)
                pl.BlockSpec((1, tn), lambda i, j, k: (0, j)),    # bias
            ],
            out_specs=pl.BlockSpec((tb, tn), lambda i, j, k: (i, j)),
            scratch_shapes=[pltpu.VMEM((tb, tn), jnp.float32)],
        ),
        compiler_params=pltpu.CompilerParams(
            dimension_semantics=("parallel", "parallel", "arbitrary"),
            vmem_limit_bytes=32 * 1024 * 1024,
        ),
    )(xp, wp, mp, bp)

    return out_padded[:B, :N]


# JIT the wrapper so pad / pallas_call / slice fuse into one executable.
sparse_connected_forward = jax.jit(sparse_connected_forward)


if __name__ == "__main__":
    key = jax.random.PRNGKey(0)
    k_x, k_w, k_b, k_m = jax.random.split(key, 4)

    batch = 4
    input_size = 32     # K
    output_size = 16    # N

    # Inputs / parameters (torch.rand -> uniform [0,1))
    x = jax.random.uniform(k_x, (batch, input_size), dtype=jnp.float32)
    weight = jax.random.uniform(k_w, (output_size, input_size), dtype=jnp.float32)
    bias = jax.random.uniform(k_b, (output_size,), dtype=jnp.float32)

    # custom_mask has shape (input_size, output_size); module stores its transpose.
    custom_mask = (jax.random.uniform(k_m, (input_size, output_size)) > 0.5).astype(
        jnp.float32
    )
    mask = custom_mask.T  # (output_size, input_size)

    out = sparse_connected_forward(x, weight, mask, bias)
    out = jax.block_until_ready(out)

    # Pure-JAX reference check
    ref = x @ (weight * mask).T + bias
    assert out.shape == (batch, output_size)
    assert jnp.allclose(out, ref, atol=1e-5, rtol=1e-5)

    print("KERNEL_OK")
</pallas_src>

<mosaic_0001>
module attributes {stable_mosaic.version = 11 : i64} {
  func.func @_sparse_linear_kernel(%arg0: i32, %arg1: i32, %arg2: i32, %arg3: memref<8x128xf32, #tpu.memory_space<vmem>>, %arg4: memref<128x128xf32, #tpu.memory_space<vmem>>, %arg5: memref<128x128xi8, #tpu.memory_space<vmem>>, %arg6: memref<1x128xf32, #tpu.memory_space<vmem>>, %arg7: memref<8x128xf32, #tpu.memory_space<vmem>>, %arg8: memref<8x128xf32, #tpu.memory_space<vmem>>) attributes {dimension_semantics = [#tpu.dimension_semantics<parallel>, #tpu.dimension_semantics<parallel>, #tpu.dimension_semantics<arbitrary>], iteration_bounds = array<i64: 1, 1, 1>, scalar_prefetch = 0 : i64, scratch_operands = 1 : i64, tpu.core_type = #tpu.core_type<tc>, window_params = [{transform_indices = @transform_0, window_bounds = array<i64: 8, 128>}, {transform_indices = @transform_1, window_bounds = array<i64: 128, 128>}, {transform_indices = @transform_2, window_bounds = array<i64: 128, 128>}, {transform_indices = @transform_3, window_bounds = array<i64: 1, 128>}, {transform_indices = @transform_4, window_bounds = array<i64: 8, 128>}]} {
    %c0_i32 = arith.constant 0 : i32
    %0 = arith.cmpi eq, %arg2, %c0_i32 : i32
    %1 = arith.extui %0 : i1 to i32
    %c0_i32_0 = arith.constant 0 : i32
    %2 = arith.cmpi ne, %1, %c0_i32_0 : i32
    scf.if %2 {
      %cst_13 = arith.constant 0.000000e+00 : f32
      %17 = vector.broadcast %cst_13 : f32 to vector<8x128xf32>
      %c0_14 = arith.constant 0 : index
      %c0_15 = arith.constant 0 : index
      %18 = vector.load %arg8[%c0_14, %c0_15] : memref<8x128xf32, #tpu.memory_space<vmem>>, vector<8x128xf32>
      tpu.vector_store %arg8[%c0_14, %c0_15], %17 {strides = array<i32>} : memref<8x128xf32, #tpu.memory_space<vmem>>, vector<8x128xf32>,
    } else {
    }
    %c0 = arith.constant 0 : index
    %c0_1 = arith.constant 0 : index
    %3 = vector.load %arg5[%c0, %c0_1] : memref<128x128xi8, #tpu.memory_space<vmem>>, vector<128x128xi8>
    %c0_i8 = arith.constant 0 : i8
    %4 = vector.broadcast %c0_i8 : i8 to vector<128x128xi8>
    %5 = arith.cmpi ne, %3, %4 : vector<128x128xi8>
    %c0_2 = arith.constant 0 : index
    %c0_3 = arith.constant 0 : index
    %6 = vector.load %arg4[%c0_2, %c0_3] : memref<128x128xf32, #tpu.memory_space<vmem>>, vector<128x128xf32>
    %cst = arith.constant 0.000000e+00 : f32
    %7 = vector.broadcast %cst : f32 to vector<128x128xf32>
    %8 = arith.select %5, %6, %7 : vector<128x128xi1>, vector<128x128xf32>
    %c0_4 = arith.constant 0 : index
    %c0_5 = arith.constant 0 : index
    %9 = vector.load %arg8[%c0_4, %c0_5] : memref<8x128xf32, #tpu.memory_space<vmem>>, vector<8x128xf32>
    %c0_6 = arith.constant 0 : index
    %c0_7 = arith.constant 0 : index
    %10 = vector.load %arg3[%c0_6, %c0_7] : memref<8x128xf32, #tpu.memory_space<vmem>>, vector<8x128xf32>
    %cst_8 = arith.constant dense<0.000000e+00> : vector<8x128xf32>
    %11 = tpu.matmul %10, %8, %cst_8 {dimension_numbers = #tpu.dot_dimension_numbers<[1], [1], [0], [0], [0, 0, 1, 0], [], []>} : vector<8x128xf32>, vector<128x128xf32>, vector<8x128xf32> -> vector<8x128xf32>
    %12 = arith.addf %9, %11 : vector<8x128xf32>
    %c0_9 = arith.constant 0 : index
    %c0_10 = arith.constant 0 : index
    %13 = vector.load %arg8[%c0_9, %c0_10] : memref<8x128xf32, #tpu.memory_space<vmem>>, vector<8x128xf32>
    tpu.vector_store %arg8[%c0_9, %c0_10], %12 {strides = array<i32>} : memref<8x128xf32, #tpu.memory_space<vmem>>, vector<8x128xf32>,
    %c0_i32_11 = arith.constant 0 : i32
    %14 = arith.cmpi eq, %arg2, %c0_i32_11 : i32
    %15 = arith.extui %14 : i1 to i32
    %c0_i32_12 = arith.constant 0 : i32
    %16 = arith.cmpi ne, %15, %c0_i32_12 : i32
    scf.if %16 {
      %c0_13 = arith.constant 0 : index
      %c0_14 = arith.constant 0 : index
      %17 = vector.load %arg8[%c0_13, %c0_14] : memref<8x128xf32, #tpu.memory_space<vmem>>, vector<8x128xf32>
      %c0_15 = arith.constant 0 : index
      %c0_16 = arith.constant 0 : index
      %18 = vector.load %arg6[%c0_15, %c0_16] : memref<1x128xf32, #tpu.memory_space<vmem>>, vector<1x128xf32>
      %19 = vector.broadcast %18 : vector<1x128xf32> to vector<8x128xf32>
      %20 = arith.addf %17, %19 : vector<8x128xf32>
      %c0_17 = arith.constant 0 : index
      %c0_18 = arith.constant 0 : index
      %21 = vector.load %arg7[%c0_17, %c0_18] : memref<8x128xf32, #tpu.memory_space<vmem>>, vector<8x128xf32>
      tpu.vector_store %arg7[%c0_17, %c0_18], %20 {strides = array<i32>} : memref<8x128xf32, #tpu.memory_space<vmem>>, vector<8x128xf32>,
    } else {
    }
    return
  }
  func.func @transform_0(%arg0: i32, %arg1: i32, %arg2: i32) -> (i32, i32) {
    %c0_i32 = arith.constant 0 : i32
    return %arg0, %arg2 : i32, i32
  }
  func.func @transform_1(%arg0: i32, %arg1: i32, %arg2: i32) -> (i32, i32) {
    %c0_i32 = arith.constant 0 : i32
    return %arg1, %arg2 : i32, i32
  }
  func.func @transform_2(%arg0: i32, %arg1: i32, %arg2: i32) -> (i32, i32) {
    %c0_i32 = arith.constant 0 : i32
    return %arg1, %arg2 : i32, i32
  }
  func.func @transform_3(%arg0: i32, %arg1: i32, %arg2: i32) -> (i32, i32) {
    %c0_i32 = arith.constant 0 : i32
    %c0_i32_0 = arith.constant 0 : i32
    return %c0_i32, %arg1 : i32, i32
  }
  func.func @transform_4(%arg0: i32, %arg1: i32, %arg2: i32) -> (i32, i32) {
    %c0_i32 = arith.constant 0 : i32
    return %arg0, %arg1 : i32, i32
  }
}

</mosaic_0001>

<llo_original>
// kernel: sparse_connected_forward.1
$region0: #{sparse_connected_forward.1}
  #allocation0 [shape = 'u32[]', space=smem, size = 0x4, offset = 0x4, fixed_abs, tag = 'smem constant byte address 0x4 - core index']
  #allocation1 [shape = 'u32[144,128]{1,0:T(1,128)}', space=vmem, size = 0x12000, scoped, tag = 'internal scratch']
  #allocation2 [shape = 'f32[8,128]{1,0:T(8,128)}', space=vmem, size = 0x1000, scoped, tag = 'scratch operand']
  %s0 = inlined_call_operand.vmem [shape: f32[8,128], index: 0, kind: input, shape index: {}]
  %s1 = inlined_call_operand.vmem [shape: f32[128,128], index: 1, kind: input, shape index: {}]
  %s2 = inlined_call_operand.vmem [shape: s8[128,128], index: 2, kind: input, shape index: {}]
  %s3 = inlined_call_operand.vmem [shape: f32[1,128], index: 3, kind: input, shape index: {}]
  %s4 = inlined_call_operand.vmem [shape: f32[8,128], index: 4, kind: output, shape index: {}]
  %s5 = sld [smem:[#allocation0]]
  $region34: #{sparse_connected_forward.1} parent=0
    _
  %s7 = ssub.s32 1, %s5
  %s8 = scalar_select 0, %s7, %s5
  // Predicated region
  $region2: #{sparse_connected_forward.1} parent=0 // pred_check
    _
  $region3: #{sparse_connected_forward.1} parent=0 // pred_check_branch
    %10 = sbr.rel (0) target = $region5
  $region4: #{sparse_connected_forward.1} parent=0 // pred_region
    _
  $region5: #{sparse_connected_forward.1} parent=0 // pred_fallthru
    _
  // Predicated region
  $region6: #{sparse_connected_forward.1} parent=0 // pred_check
    _
  $region7: #{sparse_connected_forward.1} parent=0 // pred_check_branch
    %12 = sbr.rel (0) target = $region9
  $region8: #{sparse_connected_forward.1} parent=0 // pred_region
    _
  $region9: #{sparse_connected_forward.1} parent=0 // pred_fallthru
    _
  // Predicated region
  $region10: #{sparse_connected_forward.1} parent=0 // pred_check
    _
  $region11: #{sparse_connected_forward.1} parent=0 // pred_check_branch
    %14 = sbr.rel (0) target = $region13
  $region12: #{sparse_connected_forward.1} parent=0 // pred_region
    _
  $region13: #{sparse_connected_forward.1} parent=0 // pred_fallthru
    _
  // Predicated region
  $region14: #{sparse_connected_forward.1} parent=0 // pred_check
    _
  $region15: #{sparse_connected_forward.1} parent=0 // pred_check_branch
    %16 = sbr.rel (0) target = $region17
  $region16: #{sparse_connected_forward.1} parent=0 // pred_region
    _
  $region17: #{sparse_connected_forward.1} parent=0 // pred_fallthru
    _
  %p19 = scmp.eq.s32.totalorder 0, 0
  // Predicated region
  $region18: #{sparse_connected_forward.1} parent=0 // pred_check
    %p20 = pneg %p19
  $region19: #{sparse_connected_forward.1} parent=0 // pred_check_branch
    %22 = sbr.rel (%p20) target = $region21
  $region20: #{sparse_connected_forward.1} parent=0 // pred_region
    %23 = vst [vmem:[#allocation2] sm:$0xff] 0.0
  $region21: #{sparse_connected_forward.1} parent=0 // pred_fallthru
    _
  %v24 = vld [vmem:[%s2] sm:$0xff]
  %v25 = vld [vmem:[%s2 + $0x8] sm:$0xff]
  %v26 = vld [vmem:[%s2 + $0x10] sm:$0xff]
  %v27 = vld [vmem:[%s2 + $0x18] sm:$0xff]
  %vm28 = vnez %v24
  %vm29 = vnez %v25
  %vm30 = vnez %v26
  %vm31 = vnez %v27
  %v32 = vld [vmem:[%s1] sm:$0xff]
  %v33 = vld [vmem:[%s1 + $0x8] sm:$0xff]
  %v34 = vld [vmem:[%s1 + $0x10] sm:$0xff]
  %v35 = vld [vmem:[%s1 + $0x18] sm:$0xff]
  %v36 = vld [vmem:[%s1 + $0x20] sm:$0xff]
  %v37 = vld [vmem:[%s1 + $0x28] sm:$0xff]
  %v38 = vld [vmem:[%s1 + $0x30] sm:$0xff]
  %v39 = vld [vmem:[%s1 + $0x38] sm:$0xff]
  %v40 = vld [vmem:[%s1 + $0x40] sm:$0xff]
  %v41 = vld [vmem:[%s1 + $0x48] sm:$0xff]
  %v42 = vld [vmem:[%s1 + $0x50] sm:$0xff]
  %v43 = vld [vmem:[%s1 + $0x58] sm:$0xff]
  %v44 = vld [vmem:[%s1 + $0x60] sm:$0xff]
  %v45 = vld [vmem:[%s1 + $0x68] sm:$0xff]
  %v46 = vld [vmem:[%s1 + $0x70] sm:$0xff]
  %v47 = vld [vmem:[%s1 + $0x78] sm:$0xff]
  %v48 = vsel %vm28, 16843009, 0
  %v49 = vsel %vm29, 16843009, 0
  %v50 = vsel %vm30, 16843009, 0
  %v51 = vsel %vm31, 16843009, 0
  %v52 = vunpack.c.0.s8 %v48
  %v53 = vunpack.c.1.s8 %v48
  %v54 = vunpack.c.2.s8 %v48
  %v55 = vunpack.c.3.s8 %v48
  %v56 = vunpack.c.0.s8 %v49
  %v57 = vunpack.c.1.s8 %v49
  %v58 = vunpack.c.2.s8 %v49
  %v59 = vunpack.c.3.s8 %v49
  %v60 = vunpack.c.0.s8 %v50
  %v61 = vunpack.c.1.s8 %v50
  %v62 = vunpack.c.2.s8 %v50
  %v63 = vunpack.c.3.s8 %v50
  %v64 = vunpack.c.0.s8 %v51
  %v65 = vunpack.c.1.s8 %v51
  %v66 = vunpack.c.2.s8 %v51
  %v67 = vunpack.c.3.s8 %v51
  %v68 = vpack.c.b16 %v52, %v52
  %v69 = vpack.c.b8 %v68, %v68
  %v70 = vpack.c.b16 %v53, %v53
  %v71 = vpack.c.b8 %v70, %v70
  %v72 = vpack.c.b16 %v54, %v54
  %v73 = vpack.c.b8 %v72, %v72
  %v74 = vpack.c.b16 %v55, %v55
  %v75 = vpack.c.b8 %v74, %v74
  %v76 = vpack.c.b16 %v56, %v56
  %v77 = vpack.c.b8 %v76, %v76
  %v78 = vpack.c.b16 %v57, %v57
  %v79 = vpack.c.b8 %v78, %v78
  %v80 = vpack.c.b16 %v58, %v58
  %v81 = vpack.c.b8 %v80, %v80
  %v82 = vpack.c.b16 %v59, %v59
  %v83 = vpack.c.b8 %v82, %v82
  %v84 = vpack.c.b16 %v60, %v60
  %v85 = vpack.c.b8 %v84, %v84
  %v86 = vpack.c.b16 %v61, %v61
  %v87 = vpack.c.b8 %v86, %v86
  %v88 = vpack.c.b16 %v62, %v62
  %v89 = vpack.c.b8 %v88, %v88
  %v90 = vpack.c.b16 %v63, %v63
  %v91 = vpack.c.b8 %v90, %v90
  %v92 = vpack.c.b16 %v64, %v64
  %v93 = vpack.c.b8 %v92, %v92
  %v94 = vpack.c.b16 %v65, %v65
  %v95 = vpack.c.b8 %v94, %v94
  %v96 = vpack.c.b16 %v66, %v66
  %v97 = vpack.c.b8 %v96, %v96
  %v98 = vpack.c.b16 %v67, %v67
  %v99 = vpack.c.b8 %v98, %v98
  %vm100 = vnez %v69
  %vm101 = vnez %v71
  %vm102 = vnez %v73
  %vm103 = vnez %v75
  %vm104 = vnez %v77
  %vm105 = vnez %v79
  %vm106 = vnez %v81
  %vm107 = vnez %v83
  %vm108 = vnez %v85
  %vm109 = vnez %v87
  %vm110 = vnez %v89
  %vm111 = vnez %v91
  %vm112 = vnez %v93
  %vm113 = vnez %v95
  %vm114 = vnez %v97
  %vm115 = vnez %v99
  %v116 = vsel %vm100, 16843009, 0
  %v117 = vsel %vm101, 16843009, 0
  %v118 = vsel %vm102, 16843009, 0
  %v119 = vsel %vm103, 16843009, 0
  %v120 = vsel %vm104, 16843009, 0
  %v121 = vsel %vm105, 16843009, 0
  %v122 = vsel %vm106, 16843009, 0
  %v123 = vsel %vm107, 16843009, 0
  %v124 = vsel %vm108, 16843009, 0
  %v125 = vsel %vm109, 16843009, 0
  %v126 = vsel %vm110, 16843009, 0
  %v127 = vsel %vm111, 16843009, 0
  %v128 = vsel %vm112, 16843009, 0
  %v129 = vsel %vm113, 16843009, 0
  %v130 = vsel %vm114, 16843009, 0
  %v131 = vsel %vm115, 16843009, 0
  %v132 = vunpack.c.0.s8 %v116
  %v133 = vunpack.c.0.s8 %v117
  %v134 = vunpack.c.0.s8 %v118
  %v135 = vunpack.c.0.s8 %v119
  %v136 = vunpack.c.0.s8 %v120
  %v137 = vunpack.c.0.s8 %v121
  %v138 = vunpack.c.0.s8 %v122
  %v139 = vunpack.c.0.s8 %v123
  %v140 = vunpack.c.0.s8 %v124
  %v141 = vunpack.c.0.s8 %v125
  %v142 = vunpack.c.0.s8 %v126
  %v143 = vunpack.c.0.s8 %v127
  %v144 = vunpack.c.0.s8 %v128
  %v145 = vunpack.c.0.s8 %v129
  %v146 = vunpack.c.0.s8 %v130
  %v147 = vunpack.c.0.s8 %v131
  %vm148 = vcmp.ne.s32.totalorder %v132, 0
  %vm149 = vcmp.ne.s32.totalorder %v133, 0
  %vm150 = vcmp.ne.s32.totalorder %v134, 0
  %vm151 = vcmp.ne.s32.totalorder %v135, 0
  %vm152 = vcmp.ne.s32.totalorder %v136, 0
  %vm153 = vcmp.ne.s32.totalorder %v137, 0
  %vm154 = vcmp.ne.s32.totalorder %v138, 0
  %vm155 = vcmp.ne.s32.totalorder %v139, 0
  %vm156 = vcmp.ne.s32.totalorder %v140, 0
  %vm157 = vcmp.ne.s32.totalorder %v141, 0
  %vm158 = vcmp.ne.s32.totalorder %v142, 0
  %vm159 = vcmp.ne.s32.totalorder %v143, 0
  %vm160 = vcmp.ne.s32.totalorder %v144, 0
  %vm161 = vcmp.ne.s32.totalorder %v145, 0
  %vm162 = vcmp.ne.s32.totalorder %v146, 0
  %vm163 = vcmp.ne.s32.totalorder %v147, 0
  %v164 = vsel %vm148, %v32, 0.0
  %v165 = vsel %vm149, %v33, 0.0
  %v166 = vsel %vm150, %v34, 0.0
  %v167 = vsel %vm151, %v35, 0.0
  %v168 = vsel %vm152, %v36, 0.0
  %v169 = vsel %vm153, %v37, 0.0
  %v170 = vsel %vm154, %v38, 0.0
  %v171 = vsel %vm155, %v39, 0.0
  %v172 = vsel %vm156, %v40, 0.0
  %v173 = vsel %vm157, %v41, 0.0
  %v174 = vsel %vm158, %v42, 0.0
  %v175 = vsel %vm159, %v43, 0.0
  %v176 = vsel %vm160, %v44, 0.0
  %v177 = vsel %vm161, %v45, 0.0
  %v178 = vsel %vm162, %v46, 0.0
  %v179 = vsel %vm163, %v47, 0.0
  %v180 = vld [vmem:[#allocation2] sm:$0xff]
  %v181 = vld [vmem:[%s0] sm:$0xff]
  %182 = vmatprep.subr.mxu0 0.0
  %183 = vmatpush1.xpose.msra.mxu0 %v164
  %184 = vmatprep.subr.mxu0 0.0
  %185 = vmatpush1.xpose.msra.mxu0 %v165
  %186 = vmatprep.subr.mxu0 0.0
  %187 = vmatpush1.xpose.msra.mxu0 %v166
  %188 = vmatprep.subr.mxu0 0.0
  %189 = vmatpush1.xpose.msra.mxu0 %v167
  %190 = vmatprep.subr.mxu0 0.0
  %191 = vmatpush1.xpose.msra.mxu0 %v168
  %192 = vmatprep.subr.mxu0 0.0
  %193 = vmatpush1.xpose.msra.mxu0 %v169
  %194 = vmatprep.subr.mxu0 0.0
  %195 = vmatpush1.xpose.msra.mxu0 %v170
  %196 = vmatprep.subr.mxu0 0.0
  %197 = vmatpush1.xpose.msra.mxu0 %v171
  %198 = vmatprep.subr.mxu0 0.0
  %199 = vmatpush1.xpose.msra.mxu0 %v172
  %200 = vmatprep.subr.mxu0 0.0
  %201 = vmatpush1.xpose.msra.mxu0 %v173
  %202 = vmatprep.subr.mxu0 0.0
  %203 = vmatpush1.xpose.msra.mxu0 %v174
  %204 = vmatprep.subr.mxu0 0.0
  %205 = vmatpush1.xpose.msra.mxu0 %v175
  %206 = vmatprep.subr.mxu0 0.0
  %207 = vmatpush1.xpose.msra.mxu0 %v176
  %208 = vmatprep.subr.mxu0 0.0
  %209 = vmatpush1.xpose.msra.mxu0 %v177
  %210 = vmatprep.subr.mxu0 0.0
  %211 = vmatpush1.xpose.msra.mxu0 %v178
  %212 = vmatprep.subr.mxu0 0.0
  %213 = vmatpush1.xpose.msra.mxu0 %v179
  %214 = vmatprep.subr.mxu0 0.0
  %215 = vmatpush1.xpose.msra.mxu0 0.0
  %216 = vmatprep.subr.mxu0 0.0
  %217 = vmatpush1.xpose.msra.mxu0 0.0
  %218 = vmatprep.subr.mxu0 0.0
  %219 = vmatpush1.xpose.msra.mxu0 0.0
  %220 = vmatprep.subr.mxu0 0.0
  %221 = vmatpush1.xpose.msra.mxu0 0.0
  %222 = vmatprep.subr.mxu0 0.0
  %223 = vmatpush1.xpose.msra.mxu0 0.0
  %224 = vmatprep.subr.mxu0 0.0
  %225 = vmatpush1.xpose.msra.mxu0 0.0
  %226 = vmatprep.subr.mxu0 0.0
  %227 = vmatpush1.xpose.msra.mxu0 0.0
  %228 = vmatprep.subr.mxu0 0.0
  %229 = vmatpush1.xpose.msra.mxu0 0.0
  %230 = vmatprep.subr.mxu0 0.0
  %231 = vmatpush1.xpose.msra.mxu0 0.0
  %232 = vmatprep.subr.mxu0 0.0
  %233 = vmatpush1.xpose.msra.mxu0 0.0
  %234 = vmatprep.subr.mxu0 0.0
  %235 = vmatpush1.xpose.msra.mxu0 0.0
  %236 = vmatprep.subr.mxu0 0.0
  %237 = vmatpush1.xpose.msra.mxu0 0.0
  %238 = vmatprep.subr.mxu0 0.0
  %239 = vmatpush1.xpose.msra.mxu0 0.0
  %240 = vmatprep.subr.mxu0 0.0
  %241 = vmatpush1.xpose.msra.mxu0 0.0
  %242 = vmatprep.subr.mxu0 0.0
  %243 = vmatpush1.xpose.msra.mxu0 0.0
  %244 = vmatprep.subr.mxu0 0.0
  %245 = vmatpush1.xpose.msra.mxu0 0.0
  %246 = vmatprep.mubr.f32.mxu0 0.0
  %247 = vmatmul.mubr.f32.gmra.mrb[0].mxu0 %v181
  %v248 = vpop.f32.mrb[0].mxu0
  %v249 = vadd.f32 0.0, %v248
  %v250 = vpop.f32.mrb[0].mxu0
  %251 = vdwg.mxu0
  %v252 = vadd.f32 %v180, %v249
  %253 = vst [vmem:[#allocation2] sm:$0xff] %v252
  // Predicated region
  $region22: #{sparse_connected_forward.1} parent=0 // pred_check
    %p254 = pneg %p19
  $region23: #{sparse_connected_forward.1} parent=0 // pred_check_branch
    %256 = sbr.rel (%p254) target = $region25
  $region24: #{sparse_connected_forward.1} parent=0 // pred_region
    %v257 = vld [vmem:[#allocation2] sm:$0xff]
    %v258 = vld [vmem:[%s3] sm:$0x1]
    %v260 = vlaneseq
    %v261 = vshrl.u32 %v260, 7
    %v262 = vsub.s32 0, %v261
    %v263 = vrot.slane %v258, %v262
    %v265 = vadd.f32 %v257, %v263
    %266 = vst [vmem:[%s4] sm:$0xff] %v265
  $region25: #{sparse_connected_forward.1} parent=0 // pred_fallthru
    _
  // Predicated region
  $region26: #{sparse_connected_forward.1} parent=0 // pred_check
    _
  $region27: #{sparse_connected_forward.1} parent=0 // pred_check_branch
    %268 = sbr.rel (0) target = $region29
  $region28: #{sparse_connected_forward.1} parent=0 // pred_region
    _
  $region29: #{sparse_connected_forward.1} parent=0 // pred_fallthru
    _
  // Predicated region
  $region30: #{sparse_connected_forward.1} parent=0 // pred_check
    _
  $region31: #{sparse_connected_forward.1} parent=0 // pred_check_branch
    %270 = sbr.rel (0) target = $region33
  $region32: #{sparse_connected_forward.1} parent=0 // pred_region
    _
  $region33: #{sparse_connected_forward.1} parent=0 // pred_fallthru
    _

</llo_original>
